<compile_context>
chip_gen: v5e
topology: v5e:2x2
jax: 0.10.0
libtpu: 0.0.40
codegen_flags: <defaults>
</compile_context>

<pallas_src>
import functools

import jax
import jax.numpy as jnp
from jax.experimental import pallas as pl
from jax.experimental.pallas import tpu as pltpu

_LANE = 512                             # lane-dense slab width (multiple of 128)
_VMEM_TILE_BUDGET = 16 * 1024 * 1024    # bytes for the pipelined tiles (safe on v7x 64 MiB VMEM)
_VMEM_LIMIT = 32 * 1024 * 1024          # scoped VMEM limit (fits v5e/v6e/v7x)


def _round_up(x: int, m: int) -> int:
    return ((x + m - 1) // m) * m


# ----------------------------- kernels ---------------------------------------


def _reparam_hw_kernel(seed_ref, q_mu_ref, q_logvar_ref, x_ref, q_var_ref, *, log_gaussian):
    """TPU path: noise from the hardware PRNG, never touches HBM."""
    # Two independent seed words (base seed, tile id) -> decorrelated per-tile streams.
    pltpu.prng_seed(seed_ref[0], pl.program_id(0))
    loc = q_mu_ref[...].astype(jnp.float32)
    scale = jnp.exp(q_logvar_ref[...].astype(jnp.float32))        # q_var = exp(q_logvar)  (EUP)
    eps = pltpu.stateful_normal(loc.shape, jnp.float32)           # in-kernel N(0,1)
    x = loc + scale * eps                                         # reparameterization    (VPU)
    if log_gaussian:
        x = jnp.exp(x)                                            # LogGaussianPrior branch
    q_var_ref[...] = scale.astype(q_var_ref.dtype)
    x_ref[...] = x.astype(x_ref.dtype)


def _reparam_eps_kernel(q_mu_ref, q_logvar_ref, eps_ref, x_ref, q_var_ref, *, log_gaussian):
    """Portable path (non-TPU backends): eps streamed in as a third input."""
    loc = q_mu_ref[...].astype(jnp.float32)
    scale = jnp.exp(q_logvar_ref[...].astype(jnp.float32))
    x = loc + scale * eps_ref[...].astype(jnp.float32)
    if log_gaussian:
        x = jnp.exp(x)
    q_var_ref[...] = scale.astype(q_var_ref.dtype)
    x_ref[...] = x.astype(x_ref.dtype)


# ----------------------------- tiling / dispatch ------------------------------


def _plan_tiles(rows: int, bytes_per_row_pipelined: int, sublane: int):
    """Pick (tile_rows, grid) with no forced splits and no row over-padding."""
    max_rows = _VMEM_TILE_BUDGET // max(bytes_per_row_pipelined, 1)
    max_rows = max(sublane, (max_rows // sublane) * sublane)
    if rows <= max_rows:
        # Whole table in one tile: no extra grid-step overhead on single-TC v5e/v6e.
        return rows, 1
    num_tiles = pl.cdiv(rows, max_rows)
    # v7x (2 TensorCores): aim for >= 4 steps (>= 2 per core) so each core can overlap
    # prefetch/writeback with compute; the extra ~1 us of step overhead is negligible
    # at the sizes that reach this branch.
    if num_tiles < 4:
        num_tiles = min(4, max(1, rows // sublane))
    tile_rows = min(rows, _round_up(pl.cdiv(rows, num_tiles), sublane))
    grid = pl.cdiv(rows, tile_rows)   # ragged last block is masked by Pallas (no padding)
    return tile_rows, grid


def _run_reparam(q_mu2d, q_logvar2d, seed, log_gaussian, use_hw_prng):
    rows, width = q_mu2d.shape
    dtype = q_mu2d.dtype
    itemsize = jnp.dtype(dtype).itemsize
    sublane = max(8, 32 // itemsize)   # 8 for f32, 16 for bf16, 32 for int8

    # Double-buffered pipelined footprint per row of all streamed arrays.
    in_bytes = 2 * itemsize * width
    out_bytes = 2 * itemsize * width
    eps = None
    if not use_hw_prng:
        eps = jax.random.normal(jax.random.PRNGKey(seed), (rows, width), dtype=jnp.float32)
        in_bytes += 4 * width
    bytes_per_row = 2 * (in_bytes + out_bytes)

    tile_rows, grid = _plan_tiles(rows, bytes_per_row, sublane)

    out_shape = (
        jax.ShapeDtypeStruct((rows, width), dtype),
        jax.ShapeDtypeStruct((rows, width), dtype),
    )
    cparams = pltpu.CompilerParams(
        dimension_semantics=("parallel",),
        vmem_limit_bytes=_VMEM_LIMIT,
    )

    if use_hw_prng:
        kernel = functools.partial(_reparam_hw_kernel, log_gaussian=log_gaussian)
        spec = pl.BlockSpec((tile_rows, width), lambda i, seed_ref: (i, 0))
        grid_spec = pltpu.PrefetchScalarGridSpec(
            num_scalar_prefetch=1,              # seed lives in SMEM
            grid=(grid,),
            in_specs=[spec, spec],
            out_specs=[spec, spec],
        )
        seed_arr = jnp.asarray([seed], dtype=jnp.int32)
        return pl.pallas_call(kernel, out_shape=out_shape, grid_spec=grid_spec,
                              compiler_params=cparams)(seed_arr, q_mu2d, q_logvar2d)

    kernel = functools.partial(_reparam_eps_kernel, log_gaussian=log_gaussian)
    spec = pl.BlockSpec((tile_rows, width), lambda i: (i, 0))
    grid_spec = pltpu.PrefetchScalarGridSpec(
        num_scalar_prefetch=0,
        grid=(grid,),
        in_specs=[spec, spec, spec],
        out_specs=[spec, spec],
    )
    return pl.pallas_call(kernel, out_shape=out_shape, grid_spec=grid_spec,
                          compiler_params=cparams)(q_mu2d, q_logvar2d, eps)


def variational_embedding_forward(q_mu, q_logvar, seed=0, *, log_gaussian=False,
                                  use_hw_prng=None):
    """Pallas implementation of VariationalEmbedding.forward() -> (X, q_mu, q_var)."""
    assert q_mu.shape == q_logvar.shape, "q_mu and q_logvar must have the same shape"
    n_objects, init_dim = q_mu.shape
    total = n_objects * init_dim
    if use_hw_prng is None:
        use_hw_prng = jax.default_backend() == "tpu"

    # ---- fast path: natural layout, zero wrapper pad/reshape copies ----
    if init_dim % 128 == 0:
        X, q_var = _run_reparam(q_mu, q_logvar, seed, log_gaussian, use_hw_prng)
        # q_mu is an identity return of the parameter: hand back the input directly.
        return X, q_mu, q_var

    # ---- lane-ragged shapes: lane-dense (rows, 512) slab (padded only if needed) ----
    rows = pl.cdiv(total, _LANE)
    padded_total = rows * _LANE

    def to_slab(a):
        flat = a.reshape(-1)
        if padded_total != total:
            flat = jnp.pad(flat, (0, padded_total - total))
        return flat.reshape(rows, _LANE)

    x_slab, v_slab = _run_reparam(to_slab(q_mu), to_slab(q_logvar), seed,
                                  log_gaussian, use_hw_prng)

    def from_slab(s):
        flat = s.reshape(-1)
        if padded_total != total:
            flat = flat[:total]
        return flat.reshape(n_objects, init_dim)

    return from_slab(x_slab), q_mu, from_slab(v_slab)


# TODO(synk): prune_dimensions / sorted_pruned_params (CDF-based pruning, argsort,
# torch.distributions sampling to numpy) are host-side utilities outside forward()
# and are not translated to Pallas.


if __name__ == "__main__":
    key = jax.random.PRNGKey(0)

    def check(n_objects, init_dim, seed, log_gaussian=False):
        k_mu, k_lv = jax.random.split(jax.random.fold_in(key, n_objects * 131 + init_dim))
        q_mu = jax.random.normal(k_mu, (n_objects, init_dim), dtype=jnp.float32)
        q_logvar = 0.1 * jax.random.normal(k_lv, (n_objects, init_dim), dtype=jnp.float32) - 1.0

        X, q_mu_out, q_var = variational_embedding_forward(
            q_mu, q_logvar, seed=seed, log_gaussian=log_gaussian)
        jax.block_until_ready((X, q_mu_out, q_var))

        assert X.shape == (n_objects, init_dim) and X.dtype == jnp.float32
        assert q_var.shape == (n_objects, init_dim) and q_var.dtype == jnp.float32
        assert bool(jnp.allclose(q_mu_out, q_mu))                               # identity
        assert bool(jnp.allclose(q_var, jnp.exp(q_logvar), rtol=1e-4, atol=1e-6))
        assert bool(jnp.all(jnp.isfinite(X)))
        if log_gaussian:
            assert bool(jnp.all(X > 0))                                          # exp'd sample
        else:
            eps = (X - q_mu) / q_var
            eps_mean = float(jnp.mean(eps))
            eps_std = float(jnp.std(eps))
            assert -0.3 < eps_mean < 0.3, f"eps mean off: {eps_mean}"
            assert 0.7 < eps_std < 1.3, f"eps std off: {eps_std}"

    # Natural lane-dense layout (init_dim % 128 == 0): no slab, no padding.
    check(n_objects=32, init_dim=128, seed=0)
    # Lane-ragged layout (module default-ish init_dim=100): padded slab fallback.
    check(n_objects=16, init_dim=100, seed=1)
    # LogGaussianPrior branch (out = exp(loc + scale * eps)).
    check(n_objects=16, init_dim=100, seed=2, log_gaussian=True)

    print("KERNEL_OK")
</pallas_src>

<mosaic_0001>
module attributes {stable_mosaic.version = 11 : i64} {
  func.func @_reparam_eps_kernel(%arg0: i32, %arg1: memref<32x128xf32, #tpu.memory_space<vmem>>, %arg2: memref<32x128xf32, #tpu.memory_space<vmem>>, %arg3: memref<32x128xf32, #tpu.memory_space<vmem>>, %arg4: memref<32x128xf32, #tpu.memory_space<vmem>>, %arg5: memref<32x128xf32, #tpu.memory_space<vmem>>) attributes {dimension_semantics = [#tpu.dimension_semantics<parallel>], iteration_bounds = array<i64: 1>, scalar_prefetch = 0 : i64, scratch_operands = 0 : i64, tpu.core_type = #tpu.core_type<tc>, window_params = [{transform_indices = @transform_0, window_bounds = array<i64: 32, 128>}, {transform_indices = @transform_1, window_bounds = array<i64: 32, 128>}, {transform_indices = @transform_2, window_bounds = array<i64: 32, 128>}, {transform_indices = @transform_3, window_bounds = array<i64: 32, 128>}, {transform_indices = @transform_4, window_bounds = array<i64: 32, 128>}]} {
    %c0 = arith.constant 0 : index
    %c0_0 = arith.constant 0 : index
    %0 = vector.load %arg1[%c0, %c0_0] : memref<32x128xf32, #tpu.memory_space<vmem>>, vector<32x128xf32>
    %c0_1 = arith.constant 0 : index
    %c0_2 = arith.constant 0 : index
    %1 = vector.load %arg2[%c0_1, %c0_2] : memref<32x128xf32, #tpu.memory_space<vmem>>, vector<32x128xf32>
    %2 = math.exp %1 : vector<32x128xf32>
    %c0_3 = arith.constant 0 : index
    %c0_4 = arith.constant 0 : index
    %3 = vector.load %arg3[%c0_3, %c0_4] : memref<32x128xf32, #tpu.memory_space<vmem>>, vector<32x128xf32>
    %4 = arith.mulf %2, %3 : vector<32x128xf32>
    %5 = arith.addf %0, %4 : vector<32x128xf32>
    %c0_5 = arith.constant 0 : index
    %c0_6 = arith.constant 0 : index
    %6 = vector.load %arg5[%c0_5, %c0_6] : memref<32x128xf32, #tpu.memory_space<vmem>>, vector<32x128xf32>
    tpu.vector_store %arg5[%c0_5, %c0_6], %2 {strides = array<i32>} : memref<32x128xf32, #tpu.memory_space<vmem>>, vector<32x128xf32>,
    %c0_7 = arith.constant 0 : index
    %c0_8 = arith.constant 0 : index
    %7 = vector.load %arg4[%c0_7, %c0_8] : memref<32x128xf32, #tpu.memory_space<vmem>>, vector<32x128xf32>
    tpu.vector_store %arg4[%c0_7, %c0_8], %5 {strides = array<i32>} : memref<32x128xf32, #tpu.memory_space<vmem>>, vector<32x128xf32>,
    return
  }
  func.func @transform_0(%arg0: i32) -> (i32, i32) {
    %c0_i32 = arith.constant 0 : i32
    %c0_i32_0 = arith.constant 0 : i32
    return %arg0, %c0_i32 : i32, i32
  }
  func.func @transform_1(%arg0: i32) -> (i32, i32) {
    %c0_i32 = arith.constant 0 : i32
    %c0_i32_0 = arith.constant 0 : i32
    return %arg0, %c0_i32 : i32, i32
  }
  func.func @transform_2(%arg0: i32) -> (i32, i32) {
    %c0_i32 = arith.constant 0 : i32
    %c0_i32_0 = arith.constant 0 : i32
    return %arg0, %c0_i32 : i32, i32
  }
  func.func @transform_3(%arg0: i32) -> (i32, i32) {
    %c0_i32 = arith.constant 0 : i32
    %c0_i32_0 = arith.constant 0 : i32
    return %arg0, %c0_i32 : i32, i32
  }
  func.func @transform_4(%arg0: i32) -> (i32, i32) {
    %c0_i32 = arith.constant 0 : i32
    %c0_i32_0 = arith.constant 0 : i32
    return %arg0, %c0_i32 : i32, i32
  }
}

</mosaic_0001>

<llo_original>
// kernel: tpu_custom_call.1
$region0: #{tpu_custom_call.1}
  #allocation0 [shape = 'u32[]', space=smem, size = 0x4, offset = 0x4, fixed_abs, tag = 'smem constant byte address 0x4 - core index']
  #allocation1 [shape = 'u32[72,128]{1,0:T(1,128)}', space=vmem, size = 0x9000, scoped, tag = 'internal scratch']
  %s0 = inlined_call_operand.hbm [shape: f32[32,128], index: 0, kind: input, shape index: {}]
  %s1 = inlined_call_operand.hbm [shape: f32[32,128], index: 1, kind: input, shape index: {}]
  %s2 = inlined_call_operand.hbm [shape: f32[32,128], index: 2, kind: input, shape index: {}]
  %s3 = inlined_call_operand.hbm [shape: f32[32,128], index: 3, kind: output, shape index: {0}]
  %s4 = inlined_call_operand.hbm [shape: f32[32,128], index: 4, kind: output, shape index: {1}]
  %5 = xla_tuple %s3, %s4
  %s6 = sld [smem:[#allocation0]]
  $region42: #{tpu_custom_call.1} parent=0
    _
  %s8 = ssub.s32 1, %s6
  %s9 = scalar_select 0, %s8, %s6
  $region1: #{tpu_custom_call.1} parent=0
    #allocation2 [shape = 'u8[16384]{0}', space=vmem, size = 0x4000, scoped, tag = 'input window, operand 0, single buffered']
    #allocation3 [shape = 's32[1]{0}', space=sflag, size = 0x4, scoped, tag = 'scoped memory for tpu_custom_call.1']
    #allocation4 [shape = 's32[1]{0}', space=sflag, size = 0x4, scoped, tag = 'scoped memory for tpu_custom_call.1']
    #allocation5 [shape = 'u8[16384]{0}', space=vmem, size = 0x4000, scoped, tag = 'input window, operand 1, single buffered']
    #allocation6 [shape = 's32[1]{0}', space=sflag, size = 0x4, scoped, tag = 'scoped memory for tpu_custom_call.1']
    #allocation7 [shape = 'u8[16384]{0}', space=vmem, size = 0x4000, scoped, tag = 'input window, operand 2, single buffered']
    #allocation8 [shape = 'u8[16384]{0}', space=vmem, size = 0x4000, scoped, tag = 'output window, operand 0, single buffered']
    #allocation9 [shape = 'u8[16384]{0}', space=vmem, size = 0x4000, scoped, tag = 'output window, operand 1, single buffered']
    #allocation10 [shape = 's32[1]{0}', space=sflag, size = 0x4, scoped, tag = 'scoped memory for tpu_custom_call.1']
    %10 = vsyncpa [#allocation3], 0
    %11 = vsyncpa [#allocation6], 0
    %12 = vsyncpa [#allocation4], 0
    %13 = vsyncpa [#allocation10], 0
    // Predicated region
    $region2: #{tpu_custom_call.1} parent=1 // pred_check
      _
    $region3: #{tpu_custom_call.1} parent=1 // pred_check_branch
      %15 = sbr.rel (0) target = $region5
    $region4: #{tpu_custom_call.1} parent=1 // pred_region
      %17 = vsyncadd [#allocation3], 0
      %s18 = sshll.u32 %s0, 4
      %s19 = int_to_ptr.hbm [resolvable:$true] %s18
      %s20 = sshll.u32 [#allocation2], 4
      %s21 = int_to_ptr.vmem [resolvable:$true] %s20
      %26 = dma.hbm_to_vmem [thread:$0]  %s19, 512, %s21, [#allocation3], 128, 128, 8
    $region5: #{tpu_custom_call.1} parent=1 // pred_fallthru
      _
    // Predicated region
    $region6: #{tpu_custom_call.1} parent=1 // pred_check
      _
    $region7: #{tpu_custom_call.1} parent=1 // pred_check_branch
      %28 = sbr.rel (0) target = $region9
    $region8: #{tpu_custom_call.1} parent=1 // pred_region
      %30 = vsyncadd [#allocation6], 0
      %s31 = sshll.u32 %s1, 4
      %s32 = int_to_ptr.hbm [resolvable:$true] %s31
      %s33 = sshll.u32 [#allocation5], 4
      %s34 = int_to_ptr.vmem [resolvable:$true] %s33
      %39 = dma.hbm_to_vmem [thread:$0]  %s32, 512, %s34, [#allocation6], 128, 128, 8
    $region9: #{tpu_custom_call.1} parent=1 // pred_fallthru
      _
    // Predicated region
    $region10: #{tpu_custom_call.1} parent=1 // pred_check
      _
    $region11: #{tpu_custom_call.1} parent=1 // pred_check_branch
      %41 = sbr.rel (0) target = $region13
    $region12: #{tpu_custom_call.1} parent=1 // pred_region
      %43 = vsyncadd [#allocation6], 0
      %s44 = sshll.u32 %s2, 4
      %s45 = int_to_ptr.hbm [resolvable:$true] %s44
      %s46 = sshll.u32 [#allocation7], 4
      %s47 = int_to_ptr.vmem [resolvable:$true] %s46
      %52 = dma.hbm_to_vmem [thread:$0]  %s45, 512, %s47, [#allocation6], 128, 128, 8
    $region13: #{tpu_custom_call.1} parent=1 // pred_fallthru
      _
    // Predicated region
    $region14: #{tpu_custom_call.1} parent=1 // pred_check
      _
    $region15: #{tpu_custom_call.1} parent=1 // pred_check_branch
      %54 = sbr.rel (0) target = $region17
    $region16: #{tpu_custom_call.1} parent=1 // pred_region
      %56 = dma.done [#allocation3], 512
    $region17: #{tpu_custom_call.1} parent=1 // pred_fallthru
      _
    // Predicated region
    $region18: #{tpu_custom_call.1} parent=1 // pred_check
      _
    $region19: #{tpu_custom_call.1} parent=1 // pred_check_branch
      %58 = sbr.rel (0) target = $region21
    $region20: #{tpu_custom_call.1} parent=1 // pred_region
      %60 = dma.done [#allocation6], 512
    $region21: #{tpu_custom_call.1} parent=1 // pred_fallthru
      _
    // Predicated region
    $region22: #{tpu_custom_call.1} parent=1 // pred_check
      _
    $region23: #{tpu_custom_call.1} parent=1 // pred_check_branch
      %62 = sbr.rel (0) target = $region25
    $region24: #{tpu_custom_call.1} parent=1 // pred_region
      %64 = dma.done [#allocation6], 512
    $region25: #{tpu_custom_call.1} parent=1 // pred_fallthru
      _
    %v65 = vld [vmem:[#allocation2] sm:$0xff]
    %v66 = vld [vmem:[#allocation2 + $0x8] sm:$0xff]
    %v67 = vld [vmem:[#allocation2 + $0x10] sm:$0xff]
    %v68 = vld [vmem:[#allocation2 + $0x18] sm:$0xff]
    %v69 = vld [vmem:[#allocation5] sm:$0xff]
    %v70 = vld [vmem:[#allocation5 + $0x8] sm:$0xff]
    %v71 = vld [vmem:[#allocation5 + $0x10] sm:$0xff]
    %v72 = vld [vmem:[#allocation5 + $0x18] sm:$0xff]
    %v73 = vmul.f32 %v69, 1.442695
    %v74 = vpow.pop %v73
    %v75 = vmul.f32 %v70, 1.442695
    %v76 = vpow.pop %v75
    %v77 = vmul.f32 %v71, 1.442695
    %v78 = vpow.pop %v77
    %v79 = vmul.f32 %v72, 1.442695
    %v80 = vpow.pop %v79
    %v81 = vld [vmem:[#allocation7] sm:$0xff]
    %v82 = vld [vmem:[#allocation7 + $0x8] sm:$0xff]
    %v83 = vld [vmem:[#allocation7 + $0x10] sm:$0xff]
    %v84 = vld [vmem:[#allocation7 + $0x18] sm:$0xff]
    %v85 = vmul.f32 %v74, %v81
    %v86 = vmul.f32 %v76, %v82
    %v87 = vmul.f32 %v78, %v83
    %v88 = vmul.f32 %v80, %v84
    %v89 = vadd.f32 %v65, %v85
    %v90 = vadd.f32 %v66, %v86
    %v91 = vadd.f32 %v67, %v87
    %v92 = vadd.f32 %v68, %v88
    %93 = vst [vmem:[#allocation9] sm:$0xff] %v74
    %94 = vst [vmem:[#allocation9 + $0x8] sm:$0xff] %v76
    %95 = vst [vmem:[#allocation9 + $0x10] sm:$0xff] %v78
    %96 = vst [vmem:[#allocation9 + $0x18] sm:$0xff] %v80
    %97 = vst [vmem:[#allocation8] sm:$0xff] %v89
    %98 = vst [vmem:[#allocation8 + $0x8] sm:$0xff] %v90
    %99 = vst [vmem:[#allocation8 + $0x10] sm:$0xff] %v91
    %100 = vst [vmem:[#allocation8 + $0x18] sm:$0xff] %v92
    // Predicated region
    $region26: #{tpu_custom_call.1} parent=1 // pred_check
      _
    $region27: #{tpu_custom_call.1} parent=1 // pred_check_branch
      %102 = sbr.rel (0) target = $region29
    $region28: #{tpu_custom_call.1} parent=1 // pred_region
      %104 = vsyncadd [#allocation4], 0
      %s105 = sshll.u32 [#allocation8], 4
      %s106 = int_to_ptr.vmem [resolvable:$true] %s105
      %s107 = sshll.u32 %s3, 4
      %s108 = int_to_ptr.hbm [resolvable:$true] %s107
      %113 = dma.vmem_to_hbm [thread:$0]  %s106, 512, %s108, [#allocation4], 128, 128, 8
    $region29: #{tpu_custom_call.1} parent=1 // pred_fallthru
      _
    // Predicated region
    $region30: #{tpu_custom_call.1} parent=1 // pred_check
      _
    $region31: #{tpu_custom_call.1} parent=1 // pred_check_branch
      %115 = sbr.rel (0) target = $region33
    $region32: #{tpu_custom_call.1} parent=1 // pred_region
      %117 = vsyncadd [#allocation10], 0
      %s118 = sshll.u32 [#allocation9], 4
      %s119 = int_to_ptr.vmem [resolvable:$true] %s118
      %s120 = sshll.u32 %s4, 4
      %s121 = int_to_ptr.hbm [resolvable:$true] %s120
      %126 = dma.vmem_to_hbm [thread:$0]  %s119, 512, %s121, [#allocation10], 128, 128, 8
    $region33: #{tpu_custom_call.1} parent=1 // pred_fallthru
      _
    // Predicated region
    $region34: #{tpu_custom_call.1} parent=1 // pred_check
      _
    $region35: #{tpu_custom_call.1} parent=1 // pred_check_branch
      %128 = sbr.rel (0) target = $region37
    $region36: #{tpu_custom_call.1} parent=1 // pred_region
      %130 = dma.done [#allocation4], 512
    $region37: #{tpu_custom_call.1} parent=1 // pred_fallthru
      _
    // Predicated region
    $region38: #{tpu_custom_call.1} parent=1 // pred_check
      _
    $region39: #{tpu_custom_call.1} parent=1 // pred_check_branch
      %132 = sbr.rel (0) target = $region41
    $region40: #{tpu_custom_call.1} parent=1 // pred_region
      %134 = dma.done [#allocation10], 512
    $region41: #{tpu_custom_call.1} parent=1 // pred_fallthru
      _
    %135 = vsyncpa [#allocation3], 1
    %136 = vsyncpa [#allocation6], 1
    %137 = vsyncpa [#allocation4], 1
    %138 = vsyncpa [#allocation10], 1

</llo_original>
